<compile_context>
chip_gen: v7x
topology: tpu7x:2x2x1
jax: 0.10.0
libtpu: 0.0.40
codegen_flags: <defaults>
</compile_context>

<pallas_src>
import functools

import jax
import jax.numpy as jnp
from jax.experimental import pallas as pl
from jax.experimental.pallas import tpu as pltpu


def _round_up(n, m):
    return ((n + m - 1) // m) * m


def _encoder_kernel(*refs, num_hidden, out_cols):
    """Fused encoder on one batch tile.

    refs = (x_ref, w0, b0, w1, b1, ..., wh, bh, o_ref)
    Weights are (in, out); biases are (1, out); the head weight/bias are the
    concatenated [mu | log_var] projection, lane-padded to a multiple of 128.
    Only the first `out_cols` head columns are stored to HBM.
    """
    x_ref = refs[0]
    o_ref = refs[-1]
    layer_refs = refs[1:-1]

    h = x_ref[...]
    for li in range(num_hidden):
        w = layer_refs[2 * li][...]
        b = layer_refs[2 * li + 1][...]
        z = jnp.dot(h, w, preferred_element_type=jnp.float32)     # MXU, f32 acc
        z = jnp.maximum(z + b.astype(jnp.float32), 0.0)           # bias+ReLU in f32 (VPU)
        h = z.astype(w.dtype)                                     # operand dtype for next dot

    wh = layer_refs[2 * num_hidden][...]
    bh = layer_refs[2 * num_hidden + 1][...]
    y = jnp.dot(h, wh, preferred_element_type=jnp.float32) + bh.astype(jnp.float32)
    o_ref[...] = y[:, :out_cols].astype(o_ref.dtype)              # narrow HBM store


def init_variational_encoder_params(key, input_dim, latent_dim,
                                    hidden_sizes=(256, 128)):
    """Deterministic init mirroring the PyTorch module's (out, in) Linear shapes."""
    sizes = [input_dim, *hidden_sizes, latent_dim]
    params = []
    for i in range(1, len(sizes) - 1):                    # hidden layers
        key, kw, kb = jax.random.split(key, 3)
        fan_in = sizes[i - 1]
        bound = 1.0 / jnp.sqrt(fan_in)
        w = jax.random.uniform(kw, (sizes[i], sizes[i - 1]),
                               minval=-bound, maxval=bound, dtype=jnp.float32)
        b = jax.random.uniform(kb, (sizes[i],),
                               minval=-bound, maxval=bound, dtype=jnp.float32)
        params.append((w, b))
    for _ in range(2):                                    # mu head, log_var head
        key, kw, kb = jax.random.split(key, 3)
        fan_in = sizes[-2]
        bound = 1.0 / jnp.sqrt(fan_in)
        w = jax.random.uniform(kw, (sizes[-1], sizes[-2]),
                               minval=-bound, maxval=bound, dtype=jnp.float32)
        b = jax.random.uniform(kb, (sizes[-1],),
                               minval=-bound, maxval=bound, dtype=jnp.float32)
        params.append((w, b))
    return params


def pack_encoder_params(params, latent_dim, *, compute_dtype=jnp.float32,
                        lane_pad=128):
    """One-time static repack: weights -> (in, out), biases -> (1, out), mu+log_var
    heads fused into one projection lane-padded to `lane_pad`, all cast to
    `compute_dtype` (bf16 recommended on v6e/v7x; f32 for exactness)."""
    hidden = params[:-2]
    (mu_w, mu_b), (lv_w, lv_b) = params[-2], params[-1]

    packed = []
    for w, b in hidden:
        packed.append(jnp.asarray(w, jnp.float32).T.astype(compute_dtype))   # (in, out)
        packed.append(jnp.asarray(b, jnp.float32).reshape(1, -1).astype(compute_dtype))

    wh = jnp.concatenate([mu_w, lv_w], axis=0).T          # (h_last, 2*latent)
    bh = jnp.concatenate([mu_b, lv_b], axis=0).reshape(1, -1)
    head_width = _round_up(2 * latent_dim, lane_pad)      # keep MXU lane-dense
    pad = head_width - 2 * latent_dim
    if pad:
        wh = jnp.pad(wh, ((0, 0), (0, pad)))
        bh = jnp.pad(bh, ((0, 0), (0, pad)))
    packed.append(wh.astype(compute_dtype))
    packed.append(bh.astype(compute_dtype))
    return tuple(packed), len(hidden)


def variational_encoder_forward(packed, num_hidden, latent_dim, x, *,
                                block_batch=2048):
    """packed from pack_encoder_params; x: (B, input_dim) -> (mu, log_var)."""
    batch, in_dim = x.shape
    out_dtype = x.dtype
    compute_dtype = packed[0].dtype
    if x.dtype != compute_dtype:
        x = x.astype(compute_dtype)                       # bf16 operands on v6e/v7x
    out_cols = 2 * latent_dim

    # Batch tile: big tiles amortize the ~0.35 us per-grid-step overhead, but cap
    # at ceil(batch/2) so there are >=2 "parallel" steps for v7x's two TensorCores.
    granule = 8 if jnp.dtype(compute_dtype).itemsize >= 4 else 16
    tb = min(block_batch, _round_up(pl.cdiv(batch, 2), granule))
    if tb >= batch:
        tb = batch                                        # single full-extent block
    grid = (pl.cdiv(batch, tb),)                          # ragged last block: masked writeback

    def batch_map(i):
        return (i, 0)

    def const_map(i):
        return (0, 0)

    in_specs = [pl.BlockSpec((tb, in_dim), batch_map)]
    for arr in packed:                                    # weights resident across grid
        in_specs.append(pl.BlockSpec(arr.shape, const_map))
    out_specs = pl.BlockSpec((tb, out_cols), batch_map)   # narrow (real) output only

    # Advisory cost estimate so XLA schedules/overlaps this small kernel sensibly.
    itemsize = jnp.dtype(compute_dtype).itemsize
    flops = 2 * batch * sum(int(packed[2 * i].shape[0] * packed[2 * i].shape[1])
                            for i in range(num_hidden + 1))
    bytes_accessed = (batch * in_dim * itemsize
                      + batch * out_cols * jnp.dtype(out_dtype).itemsize
                      + sum(int(a.size) * itemsize for a in packed))
    cost = pl.CostEstimate(flops=flops, transcendentals=0,
                           bytes_accessed=bytes_accessed)

    out = pl.pallas_call(
        functools.partial(_encoder_kernel, num_hidden=num_hidden,
                          out_cols=out_cols),
        out_shape=jax.ShapeDtypeStruct((batch, out_cols), out_dtype),
        grid_spec=pl.GridSpec(grid=grid, in_specs=in_specs, out_specs=out_specs),
        compiler_params=pltpu.CompilerParams(
            dimension_semantics=("parallel",)),
        cost_estimate=cost,
    )(x, *packed)

    mu = out[:, :latent_dim]
    log_var = out[:, latent_dim:]
    return mu, log_var


if __name__ == "__main__":
    key = jax.random.PRNGKey(0)
    key, kx, kp = jax.random.split(key, 3)

    batch = 8
    input_dim = 32
    latent_dim = 8
    hidden_sizes = (256, 128)

    x = jax.random.normal(kx, (batch, input_dim), dtype=jnp.float32)
    params = init_variational_encoder_params(kp, input_dim, latent_dim,
                                             hidden_sizes)

    # Pure-JAX reference of the same forward pass (PyTorch-layout params).
    def ref_forward(params, xx):
        h = xx
        for w, b in params[:-2]:
            h = jnp.maximum(h @ w.T + b, 0.0)
        mu_r = h @ params[-2][0].T + params[-2][1]
        lv_r = h @ params[-1][0].T + params[-1][1]
        return mu_r, lv_r

    # 1) Exact f32 path.
    packed32, nh = pack_encoder_params(params, latent_dim,
                                       compute_dtype=jnp.float32)
    mu, log_var = variational_encoder_forward(packed32, nh, latent_dim, x)
    jax.block_until_ready((mu, log_var))
    mu_ref, lv_ref = ref_forward(params, x)
    assert mu.shape == (batch, latent_dim) and log_var.shape == (batch, latent_dim)
    assert jnp.allclose(mu, mu_ref, atol=1e-4, rtol=1e-4)
    assert jnp.allclose(log_var, lv_ref, atol=1e-4, rtol=1e-4)

    # 2) Ragged batch (not a tile multiple) exercises the cdiv grid + masked writeback.
    key, kx2 = jax.random.split(key)
    batch2 = 20
    x2 = jax.random.normal(kx2, (batch2, input_dim), dtype=jnp.float32)
    mu2, lv2 = variational_encoder_forward(packed32, nh, latent_dim, x2)
    jax.block_until_ready((mu2, lv2))
    mu2_ref, lv2_ref = ref_forward(params, x2)
    assert mu2.shape == (batch2, latent_dim)
    assert jnp.allclose(mu2, mu2_ref, atol=1e-4, rtol=1e-4)
    assert jnp.allclose(lv2, lv2_ref, atol=1e-4, rtol=1e-4)

    # 3) bf16-operand path (preferred on v6e/v7x MXUs); f32 accumulation, looser tol.
    packed16, nh16 = pack_encoder_params(params, latent_dim,
                                         compute_dtype=jnp.bfloat16)
    mu16, lv16 = variational_encoder_forward(packed16, nh16, latent_dim, x)
    jax.block_until_ready((mu16, lv16))
    assert jnp.allclose(mu16, mu_ref, atol=5e-2, rtol=5e-2)
    assert jnp.allclose(lv16, lv_ref, atol=5e-2, rtol=5e-2)

    print("KERNEL_OK")
</pallas_src>

<mosaic_0001>
module attributes {stable_mosaic.version = 11 : i64} {
  func.func @_encoder_kernel(%arg0: i32, %arg1: memref<8x32xf32, #tpu.memory_space<vmem>>, %arg2: memref<32x256xf32, #tpu.memory_space<vmem>>, %arg3: memref<1x256xf32, #tpu.memory_space<vmem>>, %arg4: memref<256x128xf32, #tpu.memory_space<vmem>>, %arg5: memref<1x128xf32, #tpu.memory_space<vmem>>, %arg6: memref<128x128xf32, #tpu.memory_space<vmem>>, %arg7: memref<1x128xf32, #tpu.memory_space<vmem>>, %arg8: memref<8x16xf32, #tpu.memory_space<vmem>>) attributes {dimension_semantics = [#tpu.dimension_semantics<parallel>], iteration_bounds = array<i64: 1>, scalar_prefetch = 0 : i64, scratch_operands = 0 : i64, tpu.core_type = #tpu.core_type<tc>, window_params = [{transform_indices = @transform_0, window_bounds = array<i64: 8, 32>}, {pipeline_mode = #tpu.pipeline_mode<synchronous>, transform_indices = @transform_1, window_bounds = array<i64: 32, 256>}, {pipeline_mode = #tpu.pipeline_mode<synchronous>, transform_indices = @transform_2, window_bounds = array<i64: 1, 256>}, {pipeline_mode = #tpu.pipeline_mode<synchronous>, transform_indices = @transform_3, window_bounds = array<i64: 256, 128>}, {pipeline_mode = #tpu.pipeline_mode<synchronous>, transform_indices = @transform_4, window_bounds = array<i64: 1, 128>}, {pipeline_mode = #tpu.pipeline_mode<synchronous>, transform_indices = @transform_5, window_bounds = array<i64: 128, 128>}, {pipeline_mode = #tpu.pipeline_mode<synchronous>, transform_indices = @transform_6, window_bounds = array<i64: 1, 128>}, {transform_indices = @transform_7, window_bounds = array<i64: 8, 16>}]} {
    %c0 = arith.constant 0 : index
    %c0_0 = arith.constant 0 : index
    %0 = vector.load %arg1[%c0, %c0_0] : memref<8x32xf32, #tpu.memory_space<vmem>>, vector<8x32xf32>
    %c0_1 = arith.constant 0 : index
    %c0_2 = arith.constant 0 : index
    %1 = vector.load %arg2[%c0_1, %c0_2] : memref<32x256xf32, #tpu.memory_space<vmem>>, vector<32x256xf32>
    %c0_3 = arith.constant 0 : index
    %c0_4 = arith.constant 0 : index
    %2 = vector.load %arg3[%c0_3, %c0_4] : memref<1x256xf32, #tpu.memory_space<vmem>>, vector<1x256xf32>
    %cst = arith.constant dense<0.000000e+00> : vector<8x256xf32>
    %3 = tpu.matmul %0, %1, %cst {dimension_numbers = #tpu.dot_dimension_numbers<[1], [0], [0], [1], [0, 0, 1, 1], [], []>} : vector<8x32xf32>, vector<32x256xf32>, vector<8x256xf32> -> vector<8x256xf32>
    %4 = vector.broadcast %2 : vector<1x256xf32> to vector<8x256xf32>
    %5 = arith.addf %3, %4 : vector<8x256xf32>
    %cst_5 = arith.constant 0.000000e+00 : f32
    %6 = vector.broadcast %cst_5 : f32 to vector<8x256xf32>
    %7 = arith.maximumf %5, %6 : vector<8x256xf32>
    %c0_6 = arith.constant 0 : index
    %c0_7 = arith.constant 0 : index
    %8 = vector.load %arg4[%c0_6, %c0_7] : memref<256x128xf32, #tpu.memory_space<vmem>>, vector<256x128xf32>
    %c0_8 = arith.constant 0 : index
    %c0_9 = arith.constant 0 : index
    %9 = vector.load %arg5[%c0_8, %c0_9] : memref<1x128xf32, #tpu.memory_space<vmem>>, vector<1x128xf32>
    %cst_10 = arith.constant dense<0.000000e+00> : vector<8x128xf32>
    %10 = tpu.matmul %7, %8, %cst_10 {dimension_numbers = #tpu.dot_dimension_numbers<[1], [0], [0], [1], [0, 0, 1, 1], [], []>} : vector<8x256xf32>, vector<256x128xf32>, vector<8x128xf32> -> vector<8x128xf32>
    %11 = vector.broadcast %9 : vector<1x128xf32> to vector<8x128xf32>
    %12 = arith.addf %10, %11 : vector<8x128xf32>
    %cst_11 = arith.constant 0.000000e+00 : f32
    %13 = vector.broadcast %cst_11 : f32 to vector<8x128xf32>
    %14 = arith.maximumf %12, %13 : vector<8x128xf32>
    %c0_12 = arith.constant 0 : index
    %c0_13 = arith.constant 0 : index
    %15 = vector.load %arg6[%c0_12, %c0_13] : memref<128x128xf32, #tpu.memory_space<vmem>>, vector<128x128xf32>
    %c0_14 = arith.constant 0 : index
    %c0_15 = arith.constant 0 : index
    %16 = vector.load %arg7[%c0_14, %c0_15] : memref<1x128xf32, #tpu.memory_space<vmem>>, vector<1x128xf32>
    %cst_16 = arith.constant dense<0.000000e+00> : vector<8x128xf32>
    %17 = tpu.matmul %14, %15, %cst_16 {dimension_numbers = #tpu.dot_dimension_numbers<[1], [0], [0], [1], [0, 0, 1, 1], [], []>} : vector<8x128xf32>, vector<128x128xf32>, vector<8x128xf32> -> vector<8x128xf32>
    %18 = vector.broadcast %16 : vector<1x128xf32> to vector<8x128xf32>
    %19 = arith.addf %17, %18 : vector<8x128xf32>
    %20 = vector.extract_strided_slice %19 {offsets = [0, 0], sizes = [8, 16], strides = [1, 1]} : vector<8x128xf32> to vector<8x16xf32>
    %c0_17 = arith.constant 0 : index
    %c0_18 = arith.constant 0 : index
    %21 = vector.load %arg8[%c0_17, %c0_18] : memref<8x16xf32, #tpu.memory_space<vmem>>, vector<8x16xf32>
    tpu.vector_store %arg8[%c0_17, %c0_18], %20 {strides = array<i32>} : memref<8x16xf32, #tpu.memory_space<vmem>>, vector<8x16xf32>,
    return
  }
  func.func @transform_0(%arg0: i32) -> (i32, i32) {
    %c0_i32 = arith.constant 0 : i32
    %c0_i32_0 = arith.constant 0 : i32
    return %arg0, %c0_i32 : i32, i32
  }
  func.func @transform_1(%arg0: i32) -> (i32, i32) {
    %c0_i32 = arith.constant 0 : i32
    %c0_i32_0 = arith.constant 0 : i32
    %c0_i32_1 = arith.constant 0 : i32
    return %c0_i32, %c0_i32_0 : i32, i32
  }
  func.func @transform_2(%arg0: i32) -> (i32, i32) {
    %c0_i32 = arith.constant 0 : i32
    %c0_i32_0 = arith.constant 0 : i32
    %c0_i32_1 = arith.constant 0 : i32
    return %c0_i32, %c0_i32_0 : i32, i32
  }
  func.func @transform_3(%arg0: i32) -> (i32, i32) {
    %c0_i32 = arith.constant 0 : i32
    %c0_i32_0 = arith.constant 0 : i32
    %c0_i32_1 = arith.constant 0 : i32
    return %c0_i32, %c0_i32_0 : i32, i32
  }
  func.func @transform_4(%arg0: i32) -> (i32, i32) {
    %c0_i32 = arith.constant 0 : i32
    %c0_i32_0 = arith.constant 0 : i32
    %c0_i32_1 = arith.constant 0 : i32
    return %c0_i32, %c0_i32_0 : i32, i32
  }
  func.func @transform_5(%arg0: i32) -> (i32, i32) {
    %c0_i32 = arith.constant 0 : i32
    %c0_i32_0 = arith.constant 0 : i32
    %c0_i32_1 = arith.constant 0 : i32
    return %c0_i32, %c0_i32_0 : i32, i32
  }
  func.func @transform_6(%arg0: i32) -> (i32, i32) {
    %c0_i32 = arith.constant 0 : i32
    %c0_i32_0 = arith.constant 0 : i32
    %c0_i32_1 = arith.constant 0 : i32
    return %c0_i32, %c0_i32_0 : i32, i32
  }
  func.func @transform_7(%arg0: i32) -> (i32, i32) {
    %c0_i32 = arith.constant 0 : i32
    %c0_i32_0 = arith.constant 0 : i32
    return %arg0, %c0_i32 : i32, i32
  }
}

</mosaic_0001>

<llo_original>
// kernel: tpu_custom_call.1
$region0: #{tpu_custom_call.1}
  #allocation0 [shape = 'u32[]', space=smem, size = 0x4, offset = 0x4, fixed_abs, tag = 'smem constant byte address 0x4 - core index']
  #allocation1 [shape = 'u32[144,128]{1,0:T(1,128)}', space=vmem, size = 0x12000, scoped, tag = 'internal scratch']
  %s0 = inlined_call_operand.hbm [shape: f32[8,32], index: 0, kind: input, shape index: {}]
  %s1 = inlined_call_operand.hbm [shape: f32[32,256], index: 1, kind: input, shape index: {}]
  %s2 = inlined_call_operand.vmem [shape: f32[1,256], index: 2, kind: input, shape index: {}]
  %s3 = inlined_call_operand.hbm [shape: f32[256,128], index: 3, kind: input, shape index: {}]
  %s4 = inlined_call_operand.vmem [shape: f32[1,128], index: 4, kind: input, shape index: {}]
  %s5 = inlined_call_operand.hbm [shape: f32[128,128], index: 5, kind: input, shape index: {}]
  %s6 = inlined_call_operand.vmem [shape: f32[1,128], index: 6, kind: input, shape index: {}]
  %s7 = inlined_call_operand.hbm [shape: f32[8,16], index: 7, kind: output, shape index: {}]
  %s8 = sld [smem:[#allocation0]]
  $region54: #{tpu_custom_call.1} parent=0
    _
  %s10 = ssub.s32 1, %s8
  %s11 = scalar_select 0, %s10, %s8
  $region1: #{tpu_custom_call.1} parent=0
    #allocation2 [shape = 'u8[4096]{0}', space=vmem, size = 0x1000, scoped, tag = 'input window, operand 0, single buffered']
    #allocation3 [shape = 's32[1]{0}', space=sflag, size = 0x4, scoped, tag = 'scoped memory for tpu_custom_call.1']
    #allocation4 [shape = 's32[1]{0}', space=sflag, size = 0x4, scoped, tag = 'scoped memory for tpu_custom_call.1']
    #allocation5 [shape = 'u8[32768]{0}', space=vmem, size = 0x8000, scoped, tag = 'input window, operand 1, single buffered']
    #allocation6 [shape = 's32[1]{0}', space=sflag, size = 0x4, scoped, tag = 'scoped memory for tpu_custom_call.1']
    #allocation7 [shape = 'u8[131072]{0}', space=vmem, size = 0x20000, scoped, tag = 'input window, operand 3, single buffered']
    #allocation8 [shape = 'u8[65536]{0}', space=vmem, size = 0x10000, scoped, tag = 'input window, operand 5, single buffered']
    #allocation9 [shape = 's32[1]{0}', space=sflag, size = 0x4, scoped, tag = 'scoped memory for tpu_custom_call.1']
    #allocation10 [shape = 'u8[4096]{0}', space=vmem, size = 0x1000, scoped, tag = 'output window, operand 0, single buffered']
    %12 = vsyncpa [#allocation3], 0
    %13 = vsyncpa [#allocation6], 0
    %14 = vsyncpa [#allocation9], 0
    %15 = vsyncpa [#allocation4], 0
    // Predicated region
    $region2: #{tpu_custom_call.1} parent=1 // pred_check
      _
    $region3: #{tpu_custom_call.1} parent=1 // pred_check_branch
      %17 = sbr.rel (0) target = $region5
    $region4: #{tpu_custom_call.1} parent=1 // pred_region
      %s19 = ssub.s32 128, 128
      %20 = vsyncadd [#allocation3], %s19
      %s22 = sshll.u32 [#allocation2], 4
      %s23 = int_to_ptr.vmem [resolvable:$true] %s22
      %25 = dma.hbm_to_vmem [thread:$0]  %s0, 128, %s23, [#allocation3]
    $region5: #{tpu_custom_call.1} parent=1 // pred_fallthru
      _
    // Predicated region
    $region6: #{tpu_custom_call.1} parent=1 // pred_check
      _
    $region7: #{tpu_custom_call.1} parent=1 // pred_check_branch
      %27 = sbr.rel (0) target = $region9
    $region8: #{tpu_custom_call.1} parent=1 // pred_region
      %s29 = ssub.s32 1024, 1024
      %30 = vsyncadd [#allocation6], %s29
      %s31 = sshll.u32 [#allocation5], 4
      %s32 = int_to_ptr.vmem [resolvable:$true] %s31
      %37 = dma.hbm_to_vmem [thread:$0]  %s1, 1024, %s32, [#allocation6], 256, 256, 16
    $region9: #{tpu_custom_call.1} parent=1 // pred_fallthru
      _
    // Predicated region
    $region10: #{tpu_custom_call.1} parent=1 // pred_check
      _
    $region11: #{tpu_custom_call.1} parent=1 // pred_check_branch
      %39 = sbr.rel (0) target = $region13
    $region12: #{tpu_custom_call.1} parent=1 // pred_region
      _
    $region13: #{tpu_custom_call.1} parent=1 // pred_fallthru
      _
    // Predicated region
    $region14: #{tpu_custom_call.1} parent=1 // pred_check
      _
    $region15: #{tpu_custom_call.1} parent=1 // pred_check_branch
      %41 = sbr.rel (0) target = $region17
    $region16: #{tpu_custom_call.1} parent=1 // pred_region
      %s43 = ssub.s32 4096, 4096
      %44 = vsyncadd [#allocation6], %s43
      %s45 = sshll.u32 [#allocation7], 4
      %s46 = int_to_ptr.vmem [resolvable:$true] %s45
      %51 = dma.hbm_to_vmem [thread:$0]  %s3, 4096, %s46, [#allocation6], 128, 128, 8
    $region17: #{tpu_custom_call.1} parent=1 // pred_fallthru
      _
    // Predicated region
    $region18: #{tpu_custom_call.1} parent=1 // pred_check
      _
    $region19: #{tpu_custom_call.1} parent=1 // pred_check_branch
      %53 = sbr.rel (0) target = $region21
    $region20: #{tpu_custom_call.1} parent=1 // pred_region
      _
    $region21: #{tpu_custom_call.1} parent=1 // pred_fallthru
      _
    // Predicated region
    $region22: #{tpu_custom_call.1} parent=1 // pred_check
      _
    $region23: #{tpu_custom_call.1} parent=1 // pred_check_branch
      %55 = sbr.rel (0) target = $region25
    $region24: #{tpu_custom_call.1} parent=1 // pred_region
      %s57 = ssub.s32 2048, 2048
      %58 = vsyncadd [#allocation9], %s57
      %s59 = sshll.u32 [#allocation8], 4
      %s60 = int_to_ptr.vmem [resolvable:$true] %s59
      %65 = dma.hbm_to_vmem [thread:$0]  %s5, 2048, %s60, [#allocation9], 128, 128, 8
    $region25: #{tpu_custom_call.1} parent=1 // pred_fallthru
      _
    // Predicated region
    $region26: #{tpu_custom_call.1} parent=1 // pred_check
      _
    $region27: #{tpu_custom_call.1} parent=1 // pred_check_branch
      %67 = sbr.rel (0) target = $region29
    $region28: #{tpu_custom_call.1} parent=1 // pred_region
      _
    $region29: #{tpu_custom_call.1} parent=1 // pred_fallthru
      _
    // Predicated region
    $region30: #{tpu_custom_call.1} parent=1 // pred_check
      _
    $region31: #{tpu_custom_call.1} parent=1 // pred_check_branch
      %69 = sbr.rel (0) target = $region33
    $region32: #{tpu_custom_call.1} parent=1 // pred_region
      %70 = dma.done [#allocation3], 128
    $region33: #{tpu_custom_call.1} parent=1 // pred_fallthru
      _
    // Predicated region
    $region34: #{tpu_custom_call.1} parent=1 // pred_check
      _
    $region35: #{tpu_custom_call.1} parent=1 // pred_check_branch
      %72 = sbr.rel (0) target = $region37
    $region36: #{tpu_custom_call.1} parent=1 // pred_region
      %73 = dma.done [#allocation6], 1024
    $region37: #{tpu_custom_call.1} parent=1 // pred_fallthru
      _
    // Predicated region
    $region38: #{tpu_custom_call.1} parent=1 // pred_check
      _
    $region39: #{tpu_custom_call.1} parent=1 // pred_check_branch
      %75 = sbr.rel (0) target = $region41
    $region40: #{tpu_custom_call.1} parent=1 // pred_region
      %76 = dma.done [#allocation6], 4096
    $region41: #{tpu_custom_call.1} parent=1 // pred_fallthru
      _
    // Predicated region
    $region42: #{tpu_custom_call.1} parent=1 // pred_check
      _
    $region43: #{tpu_custom_call.1} parent=1 // pred_check_branch
      %78 = sbr.rel (0) target = $region45
    $region44: #{tpu_custom_call.1} parent=1 // pred_region
      %79 = dma.done [#allocation9], 2048
    $region45: #{tpu_custom_call.1} parent=1 // pred_fallthru
      _
    %v80 = vld [vmem:[#allocation2] sm:$0xff]
    %v81 = vld [vmem:[#allocation5] sm:$0xff]
    %v82 = vld [vmem:[#allocation5 + $0x8] sm:$0xff]
    %v83 = vld [vmem:[#allocation5 + $0x10] sm:$0xff]
    %v84 = vld [vmem:[#allocation5 + $0x18] sm:$0xff]
    %v85 = vld [vmem:[#allocation5 + $0x20] sm:$0xff]
    %v86 = vld [vmem:[#allocation5 + $0x28] sm:$0xff]
    %v87 = vld [vmem:[#allocation5 + $0x30] sm:$0xff]
    %v88 = vld [vmem:[#allocation5 + $0x38] sm:$0xff]
    %v89 = vld [vmem:[%s2] sm:$0x3]
    %v91 = vlaneseq
    %v92 = vshrl.u32 %v91, 7
    %v93 = vsub.s32 0, %v92
    %v94 = vrot.slane %v89, %v93
    %v95 = vlaneseq
    %v96 = vshrl.u32 %v95, 7
    %v97 = vsub.s32 1, %v96
    %v98 = vrot.slane %v89, %v97
    %vm101 = vcmask 261120
    %v103 = vsel %vm101, %v80, 0
    %105 = vmatprep.subr.mxu0 %v82
    %106 = vmatpush1.msra.mxu0 %v81
    %107 = vmatprep.subr.mxu0 %v84
    %108 = vmatpush1.msra.mxu0 %v83
    %109 = vmatprep.subr.mxu0 %v86
    %110 = vmatpush1.msra.mxu0 %v85
    %111 = vmatprep.subr.mxu0 %v88
    %112 = vmatpush1.msra.mxu0 %v87
    %113 = vmatprep.subr.mxu0 0.0
    %114 = vmatpush1.msra.mxu0 0.0
    %115 = vmatprep.subr.mxu0 0.0
    %116 = vmatpush1.msra.mxu0 0.0
    %117 = vmatprep.subr.mxu0 0.0
    %118 = vmatpush1.msra.mxu0 0.0
    %119 = vmatprep.subr.mxu0 0.0
    %120 = vmatpush1.msra.mxu0 0.0
    %121 = vmatprep.subr.mxu0 0.0
    %122 = vmatpush1.msra.mxu0 0.0
    %123 = vmatprep.subr.mxu0 0.0
    %124 = vmatpush1.msra.mxu0 0.0
    %125 = vmatprep.subr.mxu0 0.0
    %126 = vmatpush1.msra.mxu0 0.0
    %127 = vmatprep.subr.mxu0 0.0
    %128 = vmatpush1.msra.mxu0 0.0
    %129 = vmatprep.subr.mxu0 0.0
    %130 = vmatpush1.msra.mxu0 0.0
    %131 = vmatprep.subr.mxu0 0.0
    %132 = vmatpush1.msra.mxu0 0.0
    %133 = vmatprep.subr.mxu0 0.0
    %134 = vmatpush1.msra.mxu0 0.0
    %135 = vmatprep.subr.mxu0 0.0
    %136 = vmatpush1.msra.mxu0 0.0
    %137 = vmatprep.subr.mxu0 0.0
    %138 = vmatpush1.msra.mxu0 0.0
    %139 = vmatprep.subr.mxu0 0.0
    %140 = vmatpush1.msra.mxu0 0.0
    %141 = vmatprep.subr.mxu0 0.0
    %142 = vmatpush1.msra.mxu0 0.0
    %143 = vmatprep.subr.mxu0 0.0
    %144 = vmatpush1.msra.mxu0 0.0
    %145 = vmatprep.subr.mxu0 0.0
    %146 = vmatpush1.msra.mxu0 0.0
    %147 = vmatprep.subr.mxu0 0.0
    %148 = vmatpush1.msra.mxu0 0.0
    %149 = vmatprep.subr.mxu0 0.0
    %150 = vmatpush1.msra.mxu0 0.0
    %151 = vmatprep.subr.mxu0 0.0
    %152 = vmatpush1.msra.mxu0 0.0
    %153 = vmatprep.subr.mxu0 0.0
    %154 = vmatpush1.msra.mxu0 0.0
    %155 = vmatprep.subr.mxu0 0.0
    %156 = vmatpush1.msra.mxu0 0.0
    %157 = vmatprep.subr.mxu0 0.0
    %158 = vmatpush1.msra.mxu0 0.0
    %159 = vmatprep.subr.mxu0 0.0
    %160 = vmatpush1.msra.mxu0 0.0
    %161 = vmatprep.subr.mxu0 0.0
    %162 = vmatpush1.msra.mxu0 0.0
    %163 = vmatprep.subr.mxu0 0.0
    %164 = vmatpush1.msra.mxu0 0.0
    %165 = vmatprep.subr.mxu0 0.0
    %166 = vmatpush1.msra.mxu0 0.0
    %167 = vmatprep.subr.mxu0 0.0
    %168 = vmatpush1.msra.mxu0 0.0
    %169 = vmatprep.mubr.f32.mxu0 0.0
    %170 = vmatmul.mubr.f32.gmra.mrb[0].mxu0 %v103
    %v171 = vpop.f32.mrb[0].mxu0
    %v172 = vadd.f32 %v94, %v171
    %v173 = vpop.f32.mrb[0].mxu0
    %v174 = vadd.f32 %v98, %v173
    %175 = vdwg.mxu0
    %v176 = vmax.f32 %v172, 0.0
    %v177 = vmax.f32 %v174, 0.0
    %v178 = vld [vmem:[#allocation7] sm:$0xff]
    %v179 = vld [vmem:[#allocation7 + $0x8] sm:$0xff]
    %v180 = vld [vmem:[#allocation7 + $0x10] sm:$0xff]
    %v181 = vld [vmem:[#allocation7 + $0x18] sm:$0xff]
    %v182 = vld [vmem:[#allocation7 + $0x20] sm:$0xff]
    %v183 = vld [vmem:[#allocation7 + $0x28] sm:$0xff]
    %v184 = vld [vmem:[#allocation7 + $0x30] sm:$0xff]
    %v185 = vld [vmem:[#allocation7 + $0x38] sm:$0xff]
    %v186 = vld [vmem:[#allocation7 + $0x40] sm:$0xff]
    %v187 = vld [vmem:[#allocation7 + $0x48] sm:$0xff]
    %v188 = vld [vmem:[#allocation7 + $0x50] sm:$0xff]
    %v189 = vld [vmem:[#allocation7 + $0x58] sm:$0xff]
    %v190 = vld [vmem:[#allocation7 + $0x60] sm:$0xff]
    %v191 = vld [vmem:[#allocation7 + $0x68] sm:$0xff]
    %v192 = vld [vmem:[#allocation7 + $0x70] sm:$0xff]
    %v193 = vld [vmem:[#allocation7 + $0x78] sm:$0xff]
    %v194 = vld [vmem:[#allocation7 + $0x80] sm:$0xff]
    %v195 = vld [vmem:[#allocation7 + $0x88] sm:$0xff]
    %v196 = vld [vmem:[#allocation7 + $0x90] sm:$0xff]
    %v197 = vld [vmem:[#allocation7 + $0x98] sm:$0xff]
    %v198 = vld [vmem:[#allocation7 + $0xa0] sm:$0xff]
    %v199 = vld [vmem:[#allocation7 + $0xa8] sm:$0xff]
    %v200 = vld [vmem:[#allocation7 + $0xb0] sm:$0xff]
    %v201 = vld [vmem:[#allocation7 + $0xb8] sm:$0xff]
    %v202 = vld [vmem:[#allocation7 + $0xc0] sm:$0xff]
    %v203 = vld [vmem:[#allocation7 + $0xc8] sm:$0xff]
    %v204 = vld [vmem:[#allocation7 + $0xd0] sm:$0xff]
    %v205 = vld [vmem:[#allocation7 + $0xd8] sm:$0xff]
    %v206 = vld [vmem:[#allocation7 + $0xe0] sm:$0xff]
    %v207 = vld [vmem:[#allocation7 + $0xe8] sm:$0xff]
    %v208 = vld [vmem:[#allocation7 + $0xf0] sm:$0xff]
    %v209 = vld [vmem:[#allocation7 + $0xf8] sm:$0xff]
    %v210 = vld [vmem:[%s4] sm:$0x1]
    %v212 = vlaneseq
    %v213 = vshrl.u32 %v212, 7
    %v214 = vsub.s32 0, %v213
    %v215 = vrot.slane %v210, %v214
    %217 = vmatprep.subr.mxu0 0.0
    %218 = vmatpush1.msra.mxu0 %v178
    %219 = vmatprep.subr.mxu0 0.0
    %220 = vmatpush1.msra.mxu0 %v179
    %221 = vmatprep.subr.mxu0 0.0
    %222 = vmatpush1.msra.mxu0 %v180
    %223 = vmatprep.subr.mxu0 0.0
    %224 = vmatpush1.msra.mxu0 %v181
    %225 = vmatprep.subr.mxu0 0.0
    %226 = vmatpush1.msra.mxu0 %v182
    %227 = vmatprep.subr.mxu0 0.0
    %228 = vmatpush1.msra.mxu0 %v183
    %229 = vmatprep.subr.mxu0 0.0
    %230 = vmatpush1.msra.mxu0 %v184
    %231 = vmatprep.subr.mxu0 0.0
    %232 = vmatpush1.msra.mxu0 %v185
    %233 = vmatprep.subr.mxu0 0.0
    %234 = vmatpush1.msra.mxu0 %v186
    %235 = vmatprep.subr.mxu0 0.0
    %236 = vmatpush1.msra.mxu0 %v187
    %237 = vmatprep.subr.mxu0 0.0
    %238 = vmatpush1.msra.mxu0 %v188
    %239 = vmatprep.subr.mxu0 0.0
    %240 = vmatpush1.msra.mxu0 %v189
    %241 = vmatprep.subr.mxu0 0.0
    %242 = vmatpush1.msra.mxu0 %v190
    %243 = vmatprep.subr.mxu0 0.0
    %244 = vmatpush1.msra.mxu0 %v191
    %245 = vmatprep.subr.mxu0 0.0
    %246 = vmatpush1.msra.mxu0 %v192
    %247 = vmatprep.subr.mxu0 0.0
    %248 = vmatpush1.msra.mxu0 %v193
    %249 = vmatprep.subr.mxu0 0.0
    %250 = vmatpush1.msra.mxu0 %v194
    %251 = vmatprep.subr.mxu0 0.0
    %252 = vmatpush1.msra.mxu0 %v195
    %253 = vmatprep.subr.mxu0 0.0
    %254 = vmatpush1.msra.mxu0 %v196
    %255 = vmatprep.subr.mxu0 0.0
    %256 = vmatpush1.msra.mxu0 %v197
    %257 = vmatprep.subr.mxu0 0.0
    %258 = vmatpush1.msra.mxu0 %v198
    %259 = vmatprep.subr.mxu0 0.0
    %260 = vmatpush1.msra.mxu0 %v199
    %261 = vmatprep.subr.mxu0 0.0
    %262 = vmatpush1.msra.mxu0 %v200
    %263 = vmatprep.subr.mxu0 0.0
    %264 = vmatpush1.msra.mxu0 %v201
    %265 = vmatprep.subr.mxu0 0.0
    %266 = vmatpush1.msra.mxu0 %v202
    %267 = vmatprep.subr.mxu0 0.0
    %268 = vmatpush1.msra.mxu0 %v203
    %269 = vmatprep.subr.mxu0 0.0
    %270 = vmatpush1.msra.mxu0 %v204
    %271 = vmatprep.subr.mxu0 0.0
    %272 = vmatpush1.msra.mxu0 %v205
    %273 = vmatprep.subr.mxu0 0.0
    %274 = vmatpush1.msra.mxu0 %v206
    %275 = vmatprep.subr.mxu0 0.0
    %276 = vmatpush1.msra.mxu0 %v207
    %277 = vmatprep.subr.mxu0 0.0
    %278 = vmatpush1.msra.mxu0 %v208
    %279 = vmatprep.subr.mxu0 0.0
    %280 = vmatpush1.msra.mxu0 %v209
    %281 = vmatprep.mubr.f32.mxu0 %v177
    %282 = vmatmul.mubr.f32.gmra.mrb[0].mxu0 %v176
    %v283 = vpop.f32.mrb[0].mxu0
    %v284 = vadd.f32 %v215, %v283
    %v285 = vpop.f32.mrb[0].mxu0
    %286 = vdwg.mxu0
    %v287 = vmax.f32 %v284, 0.0
    %v288 = vld [vmem:[#allocation8] sm:$0xff]
    %v289 = vld [vmem:[#allocation8 + $0x8] sm:$0xff]
    %v290 = vld [vmem:[#allocation8 + $0x10] sm:$0xff]
    %v291 = vld [vmem:[#allocation8 + $0x18] sm:$0xff]
    %v292 = vld [vmem:[#allocation8 + $0x20] sm:$0xff]
    %v293 = vld [vmem:[#allocation8 + $0x28] sm:$0xff]
    %v294 = vld [vmem:[#allocation8 + $0x30] sm:$0xff]
    %v295 = vld [vmem:[#allocation8 + $0x38] sm:$0xff]
    %v296 = vld [vmem:[#allocation8 + $0x40] sm:$0xff]
    %v297 = vld [vmem:[#allocation8 + $0x48] sm:$0xff]
    %v298 = vld [vmem:[#allocation8 + $0x50] sm:$0xff]
    %v299 = vld [vmem:[#allocation8 + $0x58] sm:$0xff]
    %v300 = vld [vmem:[#allocation8 + $0x60] sm:$0xff]
    %v301 = vld [vmem:[#allocation8 + $0x68] sm:$0xff]
    %v302 = vld [vmem:[#allocation8 + $0x70] sm:$0xff]
    %v303 = vld [vmem:[#allocation8 + $0x78] sm:$0xff]
    %v304 = vld [vmem:[%s6] sm:$0x1]
    %v306 = vlaneseq
    %v307 = vshrl.u32 %v306, 7
    %v308 = vsub.s32 0, %v307
    %v309 = vrot.slane %v304, %v308
    %311 = vmatprep.subr.mxu0 0.0
    %312 = vmatpush1.msra.mxu0 %v288
    %313 = vmatprep.subr.mxu0 0.0
    %314 = vmatpush1.msra.mxu0 %v289
    %315 = vmatprep.subr.mxu0 0.0
    %316 = vmatpush1.msra.mxu0 %v290
    %317 = vmatprep.subr.mxu0 0.0
    %318 = vmatpush1.msra.mxu0 %v291
    %319 = vmatprep.subr.mxu0 0.0
    %320 = vmatpush1.msra.mxu0 %v292
    %321 = vmatprep.subr.mxu0 0.0
    %322 = vmatpush1.msra.mxu0 %v293
    %323 = vmatprep.subr.mxu0 0.0
    %324 = vmatpush1.msra.mxu0 %v294
    %325 = vmatprep.subr.mxu0 0.0
    %326 = vmatpush1.msra.mxu0 %v295
    %327 = vmatprep.subr.mxu0 0.0
    %328 = vmatpush1.msra.mxu0 %v296
    %329 = vmatprep.subr.mxu0 0.0
    %330 = vmatpush1.msra.mxu0 %v297
    %331 = vmatprep.subr.mxu0 0.0
    %332 = vmatpush1.msra.mxu0 %v298
    %333 = vmatprep.subr.mxu0 0.0
    %334 = vmatpush1.msra.mxu0 %v299
    %335 = vmatprep.subr.mxu0 0.0
    %336 = vmatpush1.msra.mxu0 %v300
    %337 = vmatprep.subr.mxu0 0.0
    %338 = vmatpush1.msra.mxu0 %v301
    %339 = vmatprep.subr.mxu0 0.0
    %340 = vmatpush1.msra.mxu0 %v302
    %341 = vmatprep.subr.mxu0 0.0
    %342 = vmatpush1.msra.mxu0 %v303
    %343 = vmatprep.subr.mxu0 0.0
    %344 = vmatpush1.msra.mxu0 0.0
    %345 = vmatprep.subr.mxu0 0.0
    %346 = vmatpush1.msra.mxu0 0.0
    %347 = vmatprep.subr.mxu0 0.0
    %348 = vmatpush1.msra.mxu0 0.0
    %349 = vmatprep.subr.mxu0 0.0
    %350 = vmatpush1.msra.mxu0 0.0
    %351 = vmatprep.subr.mxu0 0.0
    %352 = vmatpush1.msra.mxu0 0.0
    %353 = vmatprep.subr.mxu0 0.0
    %354 = vmatpush1.msra.mxu0 0.0
    %355 = vmatprep.subr.mxu0 0.0
    %356 = vmatpush1.msra.mxu0 0.0
    %357 = vmatprep.subr.mxu0 0.0
    %358 = vmatpush1.msra.mxu0 0.0
    %359 = vmatprep.subr.mxu0 0.0
    %360 = vmatpush1.msra.mxu0 0.0
    %361 = vmatprep.subr.mxu0 0.0
    %362 = vmatpush1.msra.mxu0 0.0
    %363 = vmatprep.subr.mxu0 0.0
    %364 = vmatpush1.msra.mxu0 0.0
    %365 = vmatprep.subr.mxu0 0.0
    %366 = vmatpush1.msra.mxu0 0.0
    %367 = vmatprep.subr.mxu0 0.0
    %368 = vmatpush1.msra.mxu0 0.0
    %369 = vmatprep.subr.mxu0 0.0
    %370 = vmatpush1.msra.mxu0 0.0
    %371 = vmatprep.subr.mxu0 0.0
    %372 = vmatpush1.msra.mxu0 0.0
    %373 = vmatprep.subr.mxu0 0.0
    %374 = vmatpush1.msra.mxu0 0.0
    %375 = vmatprep.mubr.f32.mxu0 0.0
    %376 = vmatmul.mubr.f32.gmra.mrb[0].mxu0 %v287
    %v377 = vpop.f32.mrb[0].mxu0
    %v378 = vadd.f32 %v309, %v377
    %v379 = vpop.f32.mrb[0].mxu0
    %380 = vdwg.mxu0
    %vm381 = vcmask 130048
    %382 = vst.msk [vmem:[#allocation10] sm:$0xff] %vm381, %v378
    // Predicated region
    $region46: #{tpu_custom_call.1} parent=1 // pred_check
      _
    $region47: #{tpu_custom_call.1} parent=1 // pred_check_branch
      %384 = sbr.rel (0) target = $region49
    $region48: #{tpu_custom_call.1} parent=1 // pred_region
      %s386 = ssub.s32 128, 128
      %387 = vsyncadd [#allocation4], %s386
      %s389 = sshll.u32 [#allocation10], 4
      %s390 = int_to_ptr.vmem [resolvable:$true] %s389
      %392 = dma.vmem_to_hbm [thread:$0]  %s390, 128, %s7, [#allocation4]
    $region49: #{tpu_custom_call.1} parent=1 // pred_fallthru
      _
    // Predicated region
    $region50: #{tpu_custom_call.1} parent=1 // pred_check
      _
    $region51: #{tpu_custom_call.1} parent=1 // pred_check_branch
      %394 = sbr.rel (0) target = $region53
    $region52: #{tpu_custom_call.1} parent=1 // pred_region
      %395 = dma.done [#allocation4], 128
    $region53: #{tpu_custom_call.1} parent=1 // pred_fallthru
      _
    %396 = vsyncpa [#allocation3], 1
    %397 = vsyncpa [#allocation6], 1
    %398 = vsyncpa [#allocation9], 1
    %399 = vsyncpa [#allocation4], 1

</llo_original>
